<compile_context>
chip_gen: v7x
topology: tpu7x:2x2x1
jax: 0.10.0
libtpu: 0.0.40
codegen_flags: <defaults>
</compile_context>

<pallas_src>
import numpy as np
import jax
import jax.numpy as jnp
from jax.experimental import pallas as pl
from jax.experimental.pallas import tpu as pltpu

F_PAD = 128  # lane-dense padded hidden/class width (exactly 128; never more)


def _pick_batch_tile(n, max_tile=8):
    """Largest divisor of n <= max_tile, preferring an even number of grid
    steps so ("parallel",) dimension semantics balance v7x's two TCs."""
    divs = [d for d in range(1, min(n, max_tile) + 1) if n % d == 0]
    even = [d for d in divs if (n // d) % 2 == 0]
    return max(even) if even else max(divs)


# ----------------------------------------------------------------------------
# Fused kernel: conv(3x3,'same') as ONE GEMM + bias + ReLU -> mean_H -> linear
# ----------------------------------------------------------------------------
def _make_fused_kernel():
    def kernel(x_ref, cw_ref, cb_ref, pool_ref, fw_ref, fb_ref, o_ref):
        # x_ref   : (BT*H*W, TAPS*C_in)  bf16  im2col patch rows
        # cw_ref  : (TAPS*C_in, F)       bf16  conv weights (features padded)
        # cb_ref  : (1, F)               f32   conv bias (padded)
        # pool_ref: (BT*W, BT*H*W)       bf16  block-diag height-mean matrix
        # fw_ref  : (F, F)               bf16  classifier weights (padded)
        # fb_ref  : (1, F)               f32   classifier bias (padded)
        # o_ref   : (BT*W, F)            f32   logits (padded)

        # Convolution = ONE K = TAPS*C_in GEMM, bf16 x bf16 -> f32 (full MXU rate).
        acc = jnp.dot(x_ref[...], cw_ref[...],
                      preferred_element_type=jnp.float32)          # (BT*HW, F)

        # Fused bias + ReLU in a single elementwise pass; bf16 for the next GEMM.
        y = jnp.maximum(acc + cb_ref[...], 0.0).astype(jnp.bfloat16)

        # Mean over H (per batch element) as one GEMM against a constant matrix.
        seq = jnp.dot(pool_ref[...], y,
                      preferred_element_type=jnp.float32)          # (BT*W, F)

        # Classifier head: lane-dense 128-wide bf16 GEMM, f32 accumulation.
        o_ref[...] = (jnp.dot(seq.astype(jnp.bfloat16), fw_ref[...],
                              preferred_element_type=jnp.float32)
                      + fb_ref[...])

    return kernel


def ocr_forward_pallas(x, params):
    """Fused forward of the inner OCR model via one pallas_call."""
    N, C_in, H, W = x.shape
    conv_w = params["conv_w"]                 # (C_hid, C_in, KH, KW)
    conv_b = params["conv_b"]                 # (C_hid,)
    fc_w = params["fc_w"]                     # (ncls, C_hid)
    fc_b = params["fc_b"]                     # (ncls,)
    C_hid, _, KH, KW = conv_w.shape
    ncls = fc_w.shape[0]
    F = F_PAD
    assert C_hid <= F and ncls <= F and KH % 2 == 1 and KW % 2 == 1
    assert W % 8 == 0 and (H * W) % 8 == 0    # keep sublane-aligned blocks

    TAPS = KH * KW
    K = TAPS * C_in
    HW = H * W
    ph, pw = KH // 2, KW // 2
    BT = _pick_batch_tile(N)
    grid = (N // BT,)

    # --- host-side layout plumbing (cheap one-time XLA ops) -----------------
    # NCHW -> NHWC, zero-pad spatially, im2col to contiguous (N*H*W, K) bf16.
    x_nhwc = jnp.transpose(x, (0, 2, 3, 1))
    x_pad = jnp.pad(x_nhwc, ((0, 0), (ph, ph), (pw, pw), (0, 0)))
    patches = [x_pad[:, di:di + H, dj:dj + W, :]
               for di in range(KH) for dj in range(KW)]
    x_rows = jnp.concatenate(patches, axis=-1).reshape(N * HW, K)
    x_rows = x_rows.astype(jnp.bfloat16)
    # TODO(synk): for production-scale images, tile H/W on the grid and pad the
    # patch width K up to 128 lanes to keep the HBM->VMEM DMA fully lane-dense.

    # Conv weights (O,I,KH,KW) -> (KH,KW,I,O) -> (K, C_hid), pad O -> F, bf16.
    cw = jnp.transpose(conv_w, (2, 3, 1, 0)).reshape(K, C_hid)
    cw = jnp.pad(cw, ((0, 0), (0, F - C_hid))).astype(jnp.bfloat16)
    cb = jnp.pad(conv_b, (0, F - C_hid)).reshape(1, F).astype(jnp.float32)

    # Classifier (ncls, C_hid) -> (C_hid, ncls), zero-pad to (F, F), bf16.
    fw = jnp.pad(fc_w.T, ((0, F - C_hid), (0, F - ncls))).astype(jnp.bfloat16)
    fb = jnp.pad(fc_b, (0, F - ncls)).reshape(1, F).astype(jnp.float32)

    # Block-diagonal height-averaging matrix for one batch tile:
    #   seq[b*W + w] = (1/H) * sum_h y[b*HW + h*W + w].
    # 1/H is exact in bf16 when H is a power of two (it is here).
    pool_np = np.zeros((BT * W, BT * HW), np.float32)
    for b in range(BT):
        for h in range(H):
            pool_np[b * W + np.arange(W), b * HW + h * W + np.arange(W)] = 1.0 / H
    pool = jnp.asarray(pool_np, dtype=jnp.bfloat16)

    kernel = _make_fused_kernel()

    # Truthful cost estimate: logical widths (C_hid, ncls), not the padded F.
    flops = int(N * (2 * HW * K * C_hid        # conv GEMM
                     + 2 * W * HW * C_hid      # height-mean GEMM
                     + 2 * W * C_hid * ncls))  # classifier GEMM
    bytes_accessed = int(x_rows.size * 2 + cw.size * 2 + cb.size * 4
                         + pool.size * 2 + fw.size * 2 + fb.size * 4
                         + N * W * F * 4)

    out = pl.pallas_call(
        kernel,
        out_shape=jax.ShapeDtypeStruct((N * W, F), jnp.float32),
        grid_spec=pltpu.PrefetchScalarGridSpec(
            num_scalar_prefetch=0,
            grid=grid,
            in_specs=[
                pl.BlockSpec((BT * HW, K), lambda n: (n, 0)),      # x patches
                pl.BlockSpec((K, F), lambda n: (0, 0)),            # conv w
                pl.BlockSpec((1, F), lambda n: (0, 0)),            # conv b
                pl.BlockSpec((BT * W, BT * HW), lambda n: (0, 0)),  # pool
                pl.BlockSpec((F, F), lambda n: (0, 0)),            # fc w
                pl.BlockSpec((1, F), lambda n: (0, 0)),            # fc b
            ],
            out_specs=pl.BlockSpec((BT * W, F), lambda n: (n, 0)),
        ),
        compiler_params=pltpu.CompilerParams(
            dimension_semantics=("parallel",)),
        cost_estimate=pl.CostEstimate(flops=flops, transcendentals=0,
                                      bytes_accessed=bytes_accessed),
    )(x_rows, cw, cb, pool, fw, fb)

    return out.reshape(N, W, F)[:, :, :ncls]   # crop padded classes


# ----------------------------------------------------------------------------
# Wrapper: exact semantics of the PyTorch module — pure delegation
# ----------------------------------------------------------------------------
class Wrapper:
    def __init__(self, model):
        self.module = model

    def __call__(self, *inputs, **kwargs):
        return self.module(*inputs, **kwargs)


# ----------------------------------------------------------------------------
# Plain-JAX reference for the correctness check
# ----------------------------------------------------------------------------
def inner_ocr_model_ref(x, params):
    conv_w, conv_b, fc_w, fc_b = (params["conv_w"], params["conv_b"],
                                  params["fc_w"], params["fc_b"])
    y = jax.lax.conv_general_dilated(
        x, conv_w, window_strides=(1, 1), padding="SAME",
        dimension_numbers=("NCHW", "OIHW", "NCHW"))
    y = jnp.maximum(y + conv_b[None, :, None, None], 0.0)        # (N, Ch, H, W)
    seq = jnp.mean(y, axis=2)                                    # (N, Ch, W)
    seq = jnp.transpose(seq, (0, 2, 1))                          # (N, W, Ch)
    return jnp.einsum("nwc,kc->nwk", seq, fc_w) + fc_b[None, None, :]


if __name__ == "__main__":
    key = jax.random.PRNGKey(0)
    k_x, k_cw, k_cb, k_fw, k_fb = jax.random.split(key, 5)

    # small shapes consistent with an NCHW conv forward
    N, C_IN, H, W = 2, 4, 16, 16
    C_HID, NCLS = 8, 10

    x = jax.random.normal(k_x, (N, C_IN, H, W), dtype=jnp.float32)
    params = {
        "conv_w": 0.1 * jax.random.normal(k_cw, (C_HID, C_IN, 3, 3), jnp.float32),
        "conv_b": 0.1 * jax.random.normal(k_cb, (C_HID,), jnp.float32),
        "fc_w":   0.1 * jax.random.normal(k_fw, (NCLS, C_HID), jnp.float32),
        "fc_b":   0.1 * jax.random.normal(k_fb, (NCLS,), jnp.float32),
    }

    model = jax.jit(lambda inp: ocr_forward_pallas(inp, params))
    wrapped = Wrapper(model)                  # passthrough, like the torch Wrapper

    out = jax.block_until_ready(wrapped(x))
    ref = jax.block_until_ready(inner_ocr_model_ref(x, params))

    assert out.shape == (N, W, NCLS), out.shape
    # bf16 activations / weights with f32 accumulation -> ~1e-3 abs error on
    # O(0.1) logits; tolerance loosened accordingly.
    assert jnp.allclose(out, ref, atol=2e-2, rtol=2e-2), "mismatch vs reference"
    print("KERNEL_OK")
</pallas_src>

<mosaic_0001>
module attributes {stable_mosaic.version = 11 : i64} {
  func.func @kernel(%arg0: i32, %arg1: memref<256x36xbf16, #tpu.memory_space<vmem>>, %arg2: memref<36x128xbf16, #tpu.memory_space<vmem>>, %arg3: memref<1x128xf32, #tpu.memory_space<vmem>>, %arg4: memref<16x256xbf16, #tpu.memory_space<vmem>>, %arg5: memref<128x128xbf16, #tpu.memory_space<vmem>>, %arg6: memref<1x128xf32, #tpu.memory_space<vmem>>, %arg7: memref<16x128xf32, #tpu.memory_space<vmem>>) attributes {dimension_semantics = [#tpu.dimension_semantics<parallel>], iteration_bounds = array<i64: 2>, scalar_prefetch = 0 : i64, scratch_operands = 0 : i64, tpu.core_type = #tpu.core_type<tc>, window_params = [{transform_indices = @transform_0, window_bounds = array<i64: 256, 36>}, {pipeline_mode = #tpu.pipeline_mode<synchronous>, transform_indices = @transform_1, window_bounds = array<i64: 36, 128>}, {pipeline_mode = #tpu.pipeline_mode<synchronous>, transform_indices = @transform_2, window_bounds = array<i64: 1, 128>}, {pipeline_mode = #tpu.pipeline_mode<synchronous>, transform_indices = @transform_3, window_bounds = array<i64: 16, 256>}, {pipeline_mode = #tpu.pipeline_mode<synchronous>, transform_indices = @transform_4, window_bounds = array<i64: 128, 128>}, {pipeline_mode = #tpu.pipeline_mode<synchronous>, transform_indices = @transform_5, window_bounds = array<i64: 1, 128>}, {transform_indices = @transform_6, window_bounds = array<i64: 16, 128>}]} {
    %c0 = arith.constant 0 : index
    %c0_0 = arith.constant 0 : index
    %0 = vector.load %arg1[%c0, %c0_0] : memref<256x36xbf16, #tpu.memory_space<vmem>>, vector<256x36xbf16>
    %c0_1 = arith.constant 0 : index
    %c0_2 = arith.constant 0 : index
    %1 = vector.load %arg2[%c0_1, %c0_2] : memref<36x128xbf16, #tpu.memory_space<vmem>>, vector<36x128xbf16>
    %cst = arith.constant dense<0.000000e+00> : vector<256x128xf32>
    %2 = tpu.matmul %0, %1, %cst {dimension_numbers = #tpu.dot_dimension_numbers<[1], [0], [0], [1], [0, 0, 1, 1], [], []>} : vector<256x36xbf16>, vector<36x128xbf16>, vector<256x128xf32> -> vector<256x128xf32>
    %c0_3 = arith.constant 0 : index
    %c0_4 = arith.constant 0 : index
    %3 = vector.load %arg3[%c0_3, %c0_4] : memref<1x128xf32, #tpu.memory_space<vmem>>, vector<1x128xf32>
    %4 = vector.broadcast %3 : vector<1x128xf32> to vector<256x128xf32>
    %5 = arith.addf %2, %4 : vector<256x128xf32>
    %cst_5 = arith.constant 0.000000e+00 : f32
    %6 = vector.broadcast %cst_5 : f32 to vector<256x128xf32>
    %7 = arith.maximumf %5, %6 : vector<256x128xf32>
    %8 = arith.truncf %7 : vector<256x128xf32> to vector<256x128xbf16>
    %c0_6 = arith.constant 0 : index
    %c0_7 = arith.constant 0 : index
    %9 = vector.load %arg4[%c0_6, %c0_7] : memref<16x256xbf16, #tpu.memory_space<vmem>>, vector<16x256xbf16>
    %cst_8 = arith.constant dense<0.000000e+00> : vector<16x128xf32>
    %10 = tpu.matmul %9, %8, %cst_8 {dimension_numbers = #tpu.dot_dimension_numbers<[1], [0], [0], [1], [0, 0, 1, 1], [], []>} : vector<16x256xbf16>, vector<256x128xbf16>, vector<16x128xf32> -> vector<16x128xf32>
    %11 = arith.truncf %10 : vector<16x128xf32> to vector<16x128xbf16>
    %c0_9 = arith.constant 0 : index
    %c0_10 = arith.constant 0 : index
    %12 = vector.load %arg5[%c0_9, %c0_10] : memref<128x128xbf16, #tpu.memory_space<vmem>>, vector<128x128xbf16>
    %cst_11 = arith.constant dense<0.000000e+00> : vector<16x128xf32>
    %13 = tpu.matmul %11, %12, %cst_11 {dimension_numbers = #tpu.dot_dimension_numbers<[1], [0], [0], [1], [0, 0, 1, 1], [], []>} : vector<16x128xbf16>, vector<128x128xbf16>, vector<16x128xf32> -> vector<16x128xf32>
    %c0_12 = arith.constant 0 : index
    %c0_13 = arith.constant 0 : index
    %14 = vector.load %arg6[%c0_12, %c0_13] : memref<1x128xf32, #tpu.memory_space<vmem>>, vector<1x128xf32>
    %15 = vector.broadcast %14 : vector<1x128xf32> to vector<16x128xf32>
    %16 = arith.addf %13, %15 : vector<16x128xf32>
    %c0_14 = arith.constant 0 : index
    %c0_15 = arith.constant 0 : index
    %17 = vector.load %arg7[%c0_14, %c0_15] : memref<16x128xf32, #tpu.memory_space<vmem>>, vector<16x128xf32>
    tpu.vector_store %arg7[%c0_14, %c0_15], %16 {strides = array<i32>} : memref<16x128xf32, #tpu.memory_space<vmem>>, vector<16x128xf32>,
    return
  }
  func.func @transform_0(%arg0: i32) -> (i32, i32) {
    %c0_i32 = arith.constant 0 : i32
    %c0_i32_0 = arith.constant 0 : i32
    return %arg0, %c0_i32 : i32, i32
  }
  func.func @transform_1(%arg0: i32) -> (i32, i32) {
    %c0_i32 = arith.constant 0 : i32
    %c0_i32_0 = arith.constant 0 : i32
    %c0_i32_1 = arith.constant 0 : i32
    return %c0_i32, %c0_i32_0 : i32, i32
  }
  func.func @transform_2(%arg0: i32) -> (i32, i32) {
    %c0_i32 = arith.constant 0 : i32
    %c0_i32_0 = arith.constant 0 : i32
    %c0_i32_1 = arith.constant 0 : i32
    return %c0_i32, %c0_i32_0 : i32, i32
  }
  func.func @transform_3(%arg0: i32) -> (i32, i32) {
    %c0_i32 = arith.constant 0 : i32
    %c0_i32_0 = arith.constant 0 : i32
    %c0_i32_1 = arith.constant 0 : i32
    return %c0_i32, %c0_i32_0 : i32, i32
  }
  func.func @transform_4(%arg0: i32) -> (i32, i32) {
    %c0_i32 = arith.constant 0 : i32
    %c0_i32_0 = arith.constant 0 : i32
    %c0_i32_1 = arith.constant 0 : i32
    return %c0_i32, %c0_i32_0 : i32, i32
  }
  func.func @transform_5(%arg0: i32) -> (i32, i32) {
    %c0_i32 = arith.constant 0 : i32
    %c0_i32_0 = arith.constant 0 : i32
    %c0_i32_1 = arith.constant 0 : i32
    return %c0_i32, %c0_i32_0 : i32, i32
  }
  func.func @transform_6(%arg0: i32) -> (i32, i32) {
    %c0_i32 = arith.constant 0 : i32
    %c0_i32_0 = arith.constant 0 : i32
    return %arg0, %c0_i32 : i32, i32
  }
}

</mosaic_0001>

<llo_original>
// kernel: _lambda_.1
$region0: #{_lambda_.1}
  #allocation0 [shape = 'u32[]', space=smem, size = 0x4, offset = 0x4, fixed_abs, tag = 'smem constant byte address 0x4 - core index']
  #allocation1 [shape = 'u32[144,128]{1,0:T(1,128)}', space=vmem, size = 0x12000, scoped, tag = 'internal scratch']
  %s0 = inlined_call_operand.vmem [shape: bf16[512,36], index: 0, kind: input, shape index: {}]
  %s1 = inlined_call_operand.vmem [shape: bf16[36,128], index: 1, kind: input, shape index: {}]
  %s2 = inlined_call_operand.vmem [shape: f32[1,128], index: 2, kind: input, shape index: {}]
  %s3 = inlined_call_operand.vmem [shape: bf16[16,256], index: 3, kind: input, shape index: {}]
  %s4 = inlined_call_operand.vmem [shape: bf16[128,128], index: 4, kind: input, shape index: {}]
  %s5 = inlined_call_operand.vmem [shape: f32[1,128], index: 5, kind: input, shape index: {}]
  %s6 = inlined_call_operand.vmem [shape: f32[32,128], index: 6, kind: output, shape index: {}]
  %s7 = sld [smem:[#allocation0]]
  $region57: #{_lambda_.1} parent=0
    _
  %s9 = ssub.s32 1, %s7
  %s10 = scalar_select 0, %s9, %s7
  loop: start=0, step=1, limit=4
  $region2: #{_lambda_.1} parent=0 // loop_pre_header
    _
  $region3: #{_lambda_.1} parent=0 // loop_header
    %s12 = sphi 0, %s16
    %p13 = scmp.ge.s32.totalorder %s12, 4
    %s22 = sphi 0, %s24
    %s25 = sphi 0, %s22
    %s26 = sphi 0, %s25
    %s42 = sphi 0, %s26
    %s46 = sphi 0, %s46
    %s48 = sphi 0, %s46
    %s49 = sphi 0, %s48
    %s63 = sphi 0, %s49
    %s67 = sphi 0, %s67
    %s69 = sphi 0, %s67
    %s70 = sphi 0, %s69
    %s84 = sphi 0, %s70
    %s88 = sphi 0, %s88
    %s90 = sphi 0, %s88
    %s91 = sphi 0, %s90
    %s105 = sphi 0, %s91
    %s109 = sphi 0, %s109
    %s111 = sphi 0, %s109
    %s112 = sphi 0, %s111
    %s126 = sphi 0, %s112
    %s130 = sphi 0, %s130
    %s132 = sphi 0, %s130
    %s133 = sphi 0, %s132
    %s147 = sphi 0, %s133
    %s153 = sphi 0, %s155
    %s156 = sphi 0, %s153
    %s157 = sphi 0, %s156
    %s173 = sphi 0, %s157
  $region4: #{_lambda_.1} parent=0 // loop_header_branch
    %15 = sbr.rel (%p13) target = $region8
  $region5: #{_lambda_.1} parent=0 // loop_body
    %s17 = ssub.s32 %s12, 1
    %s18 = ssub.s32 %s12, 2
    %s19 = sadd.s32 %s12, 1
    %s20 = ssub.s32 %s12, %s19
    %p21 = scmp.eq.s32.totalorder %s20, 0
    %s23 = sadd.s32 %s22, 1
    %s24 = scalar_select %p21, %s22, %s23
    %p27 = pneg %p21
    %p28 = scmp.eq.s32.totalorder %s12, 1
    %p29 = por %p27, %p28
    %p30 = scmp.ne.s32.totalorder %s22, %s25
    %p31 = scmp.eq.s32.totalorder %s12, 0
    %p32 = por %p30, %p31
    %p33 = scmp.ne.s32.totalorder %s22, %s25
    %p34 = scmp.eq.s32.totalorder %s17, 1
    %p35 = por %p33, %p34
    %p36 = scmp.ne.s32.totalorder %s25, %s26
    %p37 = scmp.eq.s32.totalorder %s17, 0
    %p38 = por %p36, %p37
    %p39 = scmp.ne.s32.totalorder %s25, %s26
    %p40 = scmp.eq.s32.totalorder %s18, 1
    %p41 = por %p39, %p40
    %p43 = scmp.ne.s32.totalorder %s26, %s42
    %p44 = scmp.eq.s32.totalorder %s18, 0
    %p45 = por %p43, %p44
    %s47 = sadd.s32 %s46, 1
    %p50 = scmp.eq.s32.totalorder %s12, 1
    %p51 = scmp.ne.s32.totalorder %s46, %s48
    %p52 = scmp.eq.s32.totalorder %s12, 0
    %p53 = por %p51, %p52
    %p54 = scmp.ne.s32.totalorder %s46, %s48
    %p55 = scmp.eq.s32.totalorder %s17, 1
    %p56 = por %p54, %p55
    %p57 = scmp.ne.s32.totalorder %s48, %s49
    %p58 = scmp.eq.s32.totalorder %s17, 0
    %p59 = por %p57, %p58
    %p60 = scmp.ne.s32.totalorder %s48, %s49
    %p61 = scmp.eq.s32.totalorder %s18, 1
    %p62 = por %p60, %p61
    %p64 = scmp.ne.s32.totalorder %s49, %s63
    %p65 = scmp.eq.s32.totalorder %s18, 0
    %p66 = por %p64, %p65
    %s68 = sadd.s32 %s67, 1
    %p71 = scmp.eq.s32.totalorder %s12, 1
    %p72 = scmp.ne.s32.totalorder %s67, %s69
    %p73 = scmp.eq.s32.totalorder %s12, 0
    %p74 = por %p72, %p73
    %p75 = scmp.ne.s32.totalorder %s67, %s69
    %p76 = scmp.eq.s32.totalorder %s17, 1
    %p77 = por %p75, %p76
    %p78 = scmp.ne.s32.totalorder %s69, %s70
    %p79 = scmp.eq.s32.totalorder %s17, 0
    %p80 = por %p78, %p79
    %p81 = scmp.ne.s32.totalorder %s69, %s70
    %p82 = scmp.eq.s32.totalorder %s18, 1
    %p83 = por %p81, %p82
    %p85 = scmp.ne.s32.totalorder %s70, %s84
    %p86 = scmp.eq.s32.totalorder %s18, 0
    %p87 = por %p85, %p86
    %s89 = sadd.s32 %s88, 1
    %p92 = scmp.eq.s32.totalorder %s12, 1
    %p93 = scmp.ne.s32.totalorder %s88, %s90
    %p94 = scmp.eq.s32.totalorder %s12, 0
    %p95 = por %p93, %p94
    %p96 = scmp.ne.s32.totalorder %s88, %s90
    %p97 = scmp.eq.s32.totalorder %s17, 1
    %p98 = por %p96, %p97
    %p99 = scmp.ne.s32.totalorder %s90, %s91
    %p100 = scmp.eq.s32.totalorder %s17, 0
    %p101 = por %p99, %p100
    %p102 = scmp.ne.s32.totalorder %s90, %s91
    %p103 = scmp.eq.s32.totalorder %s18, 1
    %p104 = por %p102, %p103
    %p106 = scmp.ne.s32.totalorder %s91, %s105
    %p107 = scmp.eq.s32.totalorder %s18, 0
    %p108 = por %p106, %p107
    %s110 = sadd.s32 %s109, 1
    %p113 = scmp.eq.s32.totalorder %s12, 1
    %p114 = scmp.ne.s32.totalorder %s109, %s111
    %p115 = scmp.eq.s32.totalorder %s12, 0
    %p116 = por %p114, %p115
    %p117 = scmp.ne.s32.totalorder %s109, %s111
    %p118 = scmp.eq.s32.totalorder %s17, 1
    %p119 = por %p117, %p118
    %p120 = scmp.ne.s32.totalorder %s111, %s112
    %p121 = scmp.eq.s32.totalorder %s17, 0
    %p122 = por %p120, %p121
    %p123 = scmp.ne.s32.totalorder %s111, %s112
    %p124 = scmp.eq.s32.totalorder %s18, 1
    %p125 = por %p123, %p124
    %p127 = scmp.ne.s32.totalorder %s112, %s126
    %p128 = scmp.eq.s32.totalorder %s18, 0
    %p129 = por %p127, %p128
    %s131 = sadd.s32 %s130, 1
    %p134 = scmp.eq.s32.totalorder %s12, 1
    %p135 = scmp.ne.s32.totalorder %s130, %s132
    %p136 = scmp.eq.s32.totalorder %s12, 0
    %p137 = por %p135, %p136
    %p138 = scmp.ne.s32.totalorder %s130, %s132
    %p139 = scmp.eq.s32.totalorder %s17, 1
    %p140 = por %p138, %p139
    %p141 = scmp.ne.s32.totalorder %s132, %s133
    %p142 = scmp.eq.s32.totalorder %s17, 0
    %p143 = por %p141, %p142
    %p144 = scmp.ne.s32.totalorder %s132, %s133
    %p145 = scmp.eq.s32.totalorder %s18, 1
    %p146 = por %p144, %p145
    %p148 = scmp.ne.s32.totalorder %s133, %s147
    %p149 = scmp.eq.s32.totalorder %s18, 0
    %p150 = por %p148, %p149
    %s151 = ssub.s32 %s12, %s19
    %p152 = scmp.eq.s32.totalorder %s151, 0
    %s154 = sadd.s32 %s153, 1
    %s155 = scalar_select %p152, %s153, %s154
    %p158 = pneg %p152
    %p159 = scmp.eq.s32.totalorder %s12, 1
    %p160 = por %p158, %p159
    %p161 = scmp.ne.s32.totalorder %s153, %s156
    %p162 = scmp.eq.s32.totalorder %s12, 0
    %p163 = por %p161, %p162
    %p164 = scmp.ne.s32.totalorder %s153, %s156
    %p165 = scmp.eq.s32.totalorder %s17, 1
    %p166 = por %p164, %p165
    %p167 = scmp.ne.s32.totalorder %s156, %s157
    %p168 = scmp.eq.s32.totalorder %s17, 0
    %p169 = por %p167, %p168
    %p170 = scmp.ne.s32.totalorder %s156, %s157
    %p171 = scmp.eq.s32.totalorder %s18, 1
    %p172 = por %p170, %p171
    %p174 = scmp.ne.s32.totalorder %s157, %s173
    %p175 = scmp.eq.s32.totalorder %s18, 0
    %p176 = por %p174, %p175
    %p177 = scmp.le.s32.totalorder 1, %s12
    %p178 = scmp.lt.s32.totalorder %s12, 3
    %p179 = pnand %p177, %p178
    %p180 = pneg %p179
    // Predicated region
    $region9: #{_lambda_.1} parent=5 // pred_check
      _
    $region10: #{_lambda_.1} parent=5 // pred_check_branch
      %182 = sbr.rel (%p179) target = $region12
    $region11: #{_lambda_.1} parent=5 // pred_region
      %s183 = ssub.s32 %s12, 1
      // Predicated region
      $region13: #{_lambda_.1} parent=11 // pred_check
        %p184 = pneg %p59
      $region14: #{_lambda_.1} parent=11 // pred_check_branch
        %186 = sbr.rel (%p184) target = $region16
      $region15: #{_lambda_.1} parent=11 // pred_region
        _
      $region16: #{_lambda_.1} parent=11 // pred_fallthru
        _
      // Predicated region
      $region17: #{_lambda_.1} parent=11 // pred_check
        %p187 = pneg %p80
      $region18: #{_lambda_.1} parent=11 // pred_check_branch
        %189 = sbr.rel (%p187) target = $region20
      $region19: #{_lambda_.1} parent=11 // pred_region
        _
      $region20: #{_lambda_.1} parent=11 // pred_fallthru
        _
      // Predicated region
      $region21: #{_lambda_.1} parent=11 // pred_check
        %p190 = pneg %p101
      $region22: #{_lambda_.1} parent=11 // pred_check_branch
        %192 = sbr.rel (%p190) target = $region24
      $region23: #{_lambda_.1} parent=11 // pred_region
        _
      $region24: #{_lambda_.1} parent=11 // pred_fallthru
        _
      // Predicated region
      $region25: #{_lambda_.1} parent=11 // pred_check
        %p193 = pneg %p122
      $region26: #{_lambda_.1} parent=11 // pred_check_branch
        %195 = sbr.rel (%p193) target = $region28
      $region27: #{_lambda_.1} parent=11 // pred_region
        _
      $region28: #{_lambda_.1} parent=11 // pred_fallthru
        _
      // Predicated region
      $region29: #{_lambda_.1} parent=11 // pred_check
        %p196 = pneg %p143
      $region30: #{_lambda_.1} parent=11 // pred_check_branch
        %198 = sbr.rel (%p196) target = $region32
      $region31: #{_lambda_.1} parent=11 // pred_region
        _
      $region32: #{_lambda_.1} parent=11 // pred_fallthru
        _
    $region12: #{_lambda_.1} parent=5 // pred_fallthru
      _
    %p199 = scmp.lt.s32.totalorder %s12, 2
    // Predicated region
    $region33: #{_lambda_.1} parent=5 // pred_check
      %p200 = pneg %p199
    $region34: #{_lambda_.1} parent=5 // pred_check_branch
      %202 = sbr.rel (%p200) target = $region36
    $region35: #{_lambda_.1} parent=5 // pred_region
      // Predicated region
      $region37: #{_lambda_.1} parent=35 // pred_check
        %p203 = pneg %p32
      $region38: #{_lambda_.1} parent=35 // pred_check_branch
        %205 = sbr.rel (%p203) target = $region40
      $region39: #{_lambda_.1} parent=35 // pred_region
        %s206 = smul.u32 32, %s12
        %p207 = scmp.lt.s32.totalorder %s206, 63
        %s208 = scalar_select %p207, %s206, 63
        %s209 = smul.addr %s208, 4
        %s210 = scalar_lea.vmem %s0, %s209
        %s211 = smul.u32 32, %s12
      $region40: #{_lambda_.1} parent=35 // pred_fallthru
        _
    $region36: #{_lambda_.1} parent=5 // pred_fallthru
      _
    %p212 = scmp.le.s32.totalorder 1, %s12
    %p213 = scmp.lt.s32.totalorder %s12, 3
    %p214 = pnand %p212, %p213
    %p215 = pneg %p214
    // Predicated region
    $region41: #{_lambda_.1} parent=5 // pred_check
      _
    $region42: #{_lambda_.1} parent=5 // pred_check_branch
      %217 = sbr.rel (%p214) target = $region44
    $region43: #{_lambda_.1} parent=5 // pred_region
      %s218 = ssub.s32 %s12, 1
      %s219 = smul.u32 32, %s17
      %p220 = scmp.lt.s32.totalorder %s219, 63
      %s221 = scalar_select %p220, %s219, 63
      %s222 = smul.addr %s221, 4
      %s223 = scalar_lea.vmem %s0, %s222
      %p224 = pneg %p38
      %p225 = pneg %p35
      %p226 = pneg %p59
      %p227 = pneg %p56
      %p228 = pneg %p80
      %p229 = pneg %p77
      %p230 = pneg %p101
      %p231 = pneg %p98
      %p232 = pneg %p122
      %p233 = pneg %p119
      %p234 = pneg %p143
      %p235 = pneg %p140
      %p236 = pneg %p169
      %p237 = pneg %p166
      %s238 = smul.u32 2, %s17
      %p239 = scmp.lt.s32.totalorder %s238, 3
      %s240 = scalar_select %p239, %s238, 3
      %s241 = smul.addr %s240, 8
      %s242 = scalar_lea.vmem %s6, %s241
      %s243 = smul.u32 32, %s17
      %p244 = scmp.lt.s32.totalorder %s243, 63
      %s245 = scalar_select %p244, %s243, 63
      %s246 = smul.addr %s245, 4
      %s247 = scalar_lea.vmem %s0, %s246
      %s248 = smul.u32 32, %s17
      %s249 = smul.u32 2, %s17
      %p250 = scmp.lt.s32.totalorder %s249, 3
      %s251 = scalar_select %p250, %s249, 3
      %s252 = smul.addr %s251, 8
      %s253 = scalar_lea.vmem %s6, %s252
      %s254 = smul.u32 2, %s17
      %v256 = vld [vmem:[%s247] sm:$0xf]
      %v257 = vld [vmem:[%s247 + $0x4] sm:$0xf]
      %v258 = vld [vmem:[%s247 + $0x8] sm:$0xf]
      %v259 = vld [vmem:[%s247 + $0xc] sm:$0xf]
      %v260 = vld [vmem:[%s247 + $0x10] sm:$0xf]
      %v261 = vld [vmem:[%s247 + $0x14] sm:$0xf]
      %v262 = vld [vmem:[%s247 + $0x18] sm:$0xf]
      %v263 = vld [vmem:[%s247 + $0x1c] sm:$0xf]
      %v264 = vld [vmem:[%s247 + $0x20] sm:$0xf]
      %v265 = vld [vmem:[%s247 + $0x24] sm:$0xf]
      %v266 = vld [vmem:[%s247 + $0x28] sm:$0xf]
      %v267 = vld [vmem:[%s247 + $0x2c] sm:$0xf]
      %v268 = vld [vmem:[%s247 + $0x30] sm:$0xf]
      %v269 = vld [vmem:[%s247 + $0x34] sm:$0xf]
      %v270 = vld [vmem:[%s247 + $0x38] sm:$0xf]
      %v271 = vld [vmem:[%s247 + $0x3c] sm:$0xf]
      %v272 = vld [vmem:[%s247 + $0x40] sm:$0xf]
      %v273 = vld [vmem:[%s247 + $0x44] sm:$0xf]
      %v274 = vld [vmem:[%s247 + $0x48] sm:$0xf]
      %v275 = vld [vmem:[%s247 + $0x4c] sm:$0xf]
      %v276 = vld [vmem:[%s247 + $0x50] sm:$0xf]
      %v277 = vld [vmem:[%s247 + $0x54] sm:$0xf]
      %v278 = vld [vmem:[%s247 + $0x58] sm:$0xf]
      %v279 = vld [vmem:[%s247 + $0x5c] sm:$0xf]
      %v280 = vld [vmem:[%s247 + $0x60] sm:$0xf]
      %v281 = vld [vmem:[%s247 + $0x64] sm:$0xf]
      %v282 = vld [vmem:[%s247 + $0x68] sm:$0xf]
      %v283 = vld [vmem:[%s247 + $0x6c] sm:$0xf]
      %v284 = vld [vmem:[%s247 + $0x70] sm:$0xf]
      %v285 = vld [vmem:[%s247 + $0x74] sm:$0xf]
      %v286 = vld [vmem:[%s247 + $0x78] sm:$0xf]
      %v287 = vld [vmem:[%s247 + $0x7c] sm:$0xf]
      %v288 = vld [vmem:[%s1] sm:$0xf]
      %v289 = vld [vmem:[%s1 + $0x4] sm:$0xf]
      %v290 = vld [vmem:[%s1 + $0x8] sm:$0xf]
      %v291 = vld [vmem:[%s1 + $0xc] sm:$0xf]
      %v292 = vld [vmem:[%s1 + $0x10] sm:$0x3]
      %v293 = vld [vmem:[%s2] sm:$0x1]
      %v295 = vlaneseq
      %v296 = vshrl.u32 %v295, 7
      %v297 = vsub.s32 0, %v296
      %v298 = vrot.slane %v293, %v297
      %v332 = vunpack.c.l.b16 %v256
      %v333 = vunpack.c.l.b16 %v257
      %v334 = vunpack.c.l.b16 %v258
      %v335 = vunpack.c.l.b16 %v259
      %v336 = vunpack.c.l.b16 %v260
      %v337 = vunpack.c.l.b16 %v261
      %v338 = vunpack.c.l.b16 %v262
      %v339 = vunpack.c.l.b16 %v263
      %v340 = vunpack.c.l.b16 %v264
      %v341 = vunpack.c.l.b16 %v265
      %v342 = vunpack.c.l.b16 %v266
      %v343 = vunpack.c.l.b16 %v267
      %v344 = vunpack.c.l.b16 %v268
      %v345 = vunpack.c.l.b16 %v269
      %v346 = vunpack.c.l.b16 %v270
      %v347 = vunpack.c.l.b16 %v271
      %v348 = vunpack.c.l.b16 %v272
      %v349 = vunpack.c.l.b16 %v273
      %v350 = vunpack.c.l.b16 %v274
      %v351 = vunpack.c.l.b16 %v275
      %v352 = vunpack.c.l.b16 %v276
      %v353 = vunpack.c.l.b16 %v277
      %v354 = vunpack.c.l.b16 %v278
      %v355 = vunpack.c.l.b16 %v279
      %v356 = vunpack.c.l.b16 %v280
      %v357 = vunpack.c.l.b16 %v281
      %v358 = vunpack.c.l.b16 %v282
      %v359 = vunpack.c.l.b16 %v283
      %v360 = vunpack.c.l.b16 %v284
      %v361 = vunpack.c.l.b16 %v285
      %v362 = vunpack.c.l.b16 %v286
      %v363 = vunpack.c.l.b16 %v287
      %v364 = vpack.c.b16 %v333, %v332
      %v365 = vpack.c.b16 %v335, %v334
      %v366 = vpack.c.b16 %v337, %v336
      %v367 = vpack.c.b16 %v339, %v338
      %v368 = vpack.c.b16 %v341, %v340
      %v369 = vpack.c.b16 %v343, %v342
      %v370 = vpack.c.b16 %v345, %v344
      %v371 = vpack.c.b16 %v347, %v346
      %v372 = vpack.c.b16 %v349, %v348
      %v373 = vpack.c.b16 %v351, %v350
      %v374 = vpack.c.b16 %v353, %v352
      %v375 = vpack.c.b16 %v355, %v354
      %v376 = vpack.c.b16 %v357, %v356
      %v377 = vpack.c.b16 %v359, %v358
      %v378 = vpack.c.b16 %v361, %v360
      %v379 = vpack.c.b16 %v363, %v362
      %v385 = vunpack.c.l.b16 %v288
      %v386 = vunpack.c.l.b16 %v289
      %v387 = vunpack.c.l.b16 %v290
      %v388 = vunpack.c.l.b16 %v291
      %v389 = vunpack.c.l.b16 %v292
      %v390 = vpack.c.b16 %v386, %v385
      %v391 = vpack.c.b16 %v388, %v387
      %v392 = vpack.c.b16 %v389, %v389
      %vm395 = vcmask 293888
      %v397 = vsel %vm395, %v364, 0
      %v400 = vsel %vm395, %v365, 0
      %v403 = vsel %vm395, %v366, 0
      %v406 = vsel %vm395, %v367, 0
      %v409 = vsel %vm395, %v368, 0
      %v412 = vsel %vm395, %v369, 0
      %v415 = vsel %vm395, %v370, 0
      %v418 = vsel %vm395, %v371, 0
      %v421 = vsel %vm395, %v372, 0
      %v424 = vsel %vm395, %v373, 0
      %v427 = vsel %vm395, %v374, 0
      %v430 = vsel %vm395, %v375, 0
      %v433 = vsel %vm395, %v376, 0
      %v436 = vsel %vm395, %v377, 0
      %v439 = vsel %vm395, %v378, 0
      %v442 = vsel %vm395, %v379, 0
      %vm444 = vcmask 1041408
      %v446 = vsel %vm444, %v392, 0
      %448 = vmatprep.subr.bf16.mxu0 0
      %449 = vmatpush1.bf16.msra.mxu0 %v390
      %450 = vmatprep.subr.bf16.mxu0 0
      %451 = vmatpush1.bf16.msra.mxu0 %v391
      %452 = vmatprep.subr.bf16.mxu0 0
      %453 = vmatpush1.bf16.msra.mxu0 %v446
      %454 = vmatprep.subr.bf16.mxu0 0
      %455 = vmatpush1.bf16.msra.mxu0 0
      %456 = vmatprep.subr.bf16.mxu0 0
      %457 = vmatpush1.bf16.msra.mxu0 0
      %458 = vmatprep.subr.bf16.mxu0 0
      %459 = vmatpush1.bf16.msra.mxu0 0
      %460 = vmatprep.subr.bf16.mxu0 0
      %461 = vmatpush1.bf16.msra.mxu0 0
      %462 = vmatprep.subr.bf16.mxu0 0
      %463 = vmatpush1.bf16.msra.mxu0 0
      %464 = vmatprep.subr.bf16.mxu0 0
      %465 = vmatpush1.bf16.msra.mxu0 0
      %466 = vmatprep.subr.bf16.mxu0 0
      %467 = vmatpush1.bf16.msra.mxu0 0
      %468 = vmatprep.subr.bf16.mxu0 0
      %469 = vmatpush1.bf16.msra.mxu0 0
      %470 = vmatprep.subr.bf16.mxu0 0
      %471 = vmatpush1.bf16.msra.mxu0 0
      %472 = vmatprep.subr.bf16.mxu0 0
      %473 = vmatpush1.bf16.msra.mxu0 0
      %474 = vmatprep.subr.bf16.mxu0 0
      %475 = vmatpush1.bf16.msra.mxu0 0
      %476 = vmatprep.subr.bf16.mxu0 0
      %477 = vmatpush1.bf16.msra.mxu0 0
      %478 = vmatprep.subr.bf16.mxu0 0
      %479 = vmatpush1.bf16.msra.mxu0 0
      %480 = vmatprep.mubr.bf16.mxu0 0
      %481 = vmatmul.mubr.bf16.gmra.mrb[0].mxu0 %v397
      %v482 = vpop.f32.mrb[0].mxu0
      %v483 = vadd.f32 %v298, %v482
      %v484 = vpop.f32.mrb[0].mxu0
      %v485 = vpop.f32.mrb[0].mxu0
      %v486 = vadd.f32 %v298, %v485
      %v487 = vpop.f32.mrb[0].mxu0
      %488 = vmatprep.mubr.bf16.mxu0 0
      %489 = vmatmul.mubr.bf16.gmra.mrb[0].mxu0 %v400
      %v490 = vpop.f32.mrb[0].mxu0
      %v491 = vadd.f32 %v298, %v490
      %v492 = vpop.f32.mrb[0].mxu0
      %v493 = vpop.f32.mrb[0].mxu0
      %v494 = vadd.f32 %v298, %v493
      %v495 = vpop.f32.mrb[0].mxu0
      %496 = vmatprep.mubr.bf16.mxu0 0
      %497 = vmatmul.mubr.bf16.gmra.mrb[0].mxu0 %v403
      %v498 = vpop.f32.mrb[0].mxu0
      %v499 = vadd.f32 %v298, %v498
      %v500 = vpop.f32.mrb[0].mxu0
      %v501 = vpop.f32.mrb[0].mxu0
      %v502 = vadd.f32 %v298, %v501
      %v503 = vpop.f32.mrb[0].mxu0
      %504 = vmatprep.mubr.bf16.mxu0 0
      %505 = vmatmul.mubr.bf16.gmra.mrb[0].mxu0 %v406
      %v506 = vpop.f32.mrb[0].mxu0
      %v507 = vadd.f32 %v298, %v506
      %v508 = vpop.f32.mrb[0].mxu0
      %v509 = vpop.f32.mrb[0].mxu0
      %v510 = vadd.f32 %v298, %v509
      %v511 = vpop.f32.mrb[0].mxu0
      %512 = vmatprep.mubr.bf16.mxu0 0
      %513 = vmatmul.mubr.bf16.gmra.mrb[0].mxu0 %v409
      %v514 = vpop.f32.mrb[0].mxu0
      %v515 = vadd.f32 %v298, %v514
      %v516 = vpop.f32.mrb[0].mxu0
      %v517 = vpop.f32.mrb[0].mxu0
      %v518 = vadd.f32 %v298, %v517
      %v519 = vpop.f32.mrb[0].mxu0
      %520 = vmatprep.mubr.bf16.mxu0 0
      %521 = vmatmul.mubr.bf16.gmra.mrb[0].mxu0 %v412
      %v522 = vpop.f32.mrb[0].mxu0
      %v523 = vadd.f32 %v298, %v522
      %v524 = vpop.f32.mrb[0].mxu0
      %v525 = vpop.f32.mrb[0].mxu0
      %v526 = vadd.f32 %v298, %v525
      %v527 = vpop.f32.mrb[0].mxu0
      %528 = vmatprep.mubr.bf16.mxu0 0
      %529 = vmatmul.mubr.bf16.gmra.mrb[0].mxu0 %v415
      %v530 = vpop.f32.mrb[0].mxu0
      %v531 = vadd.f32 %v298, %v530
      %v532 = vpop.f32.mrb[0].mxu0
      %v533 = vpop.f32.mrb[0].mxu0
      %v534 = vadd.f32 %v298, %v533
      %v535 = vpop.f32.mrb[0].mxu0
      %536 = vmatprep.mubr.bf16.mxu0 0
      %537 = vmatmul.mubr.bf16.gmra.mrb[0].mxu0 %v418
      %v538 = vpop.f32.mrb[0].mxu0
      %v539 = vadd.f32 %v298, %v538
      %v540 = vpop.f32.mrb[0].mxu0
      %v541 = vpop.f32.mrb[0].mxu0
      %v542 = vadd.f32 %v298, %v541
      %v543 = vpop.f32.mrb[0].mxu0
      %544 = vmatprep.mubr.bf16.mxu0 0
      %545 = vmatmul.mubr.bf16.gmra.mrb[0].mxu0 %v421
      %v546 = vpop.f32.mrb[0].mxu0
      %v547 = vadd.f32 %v298, %v546
      %v548 = vpop.f32.mrb[0].mxu0
      %v549 = vpop.f32.mrb[0].mxu0
      %v550 = vadd.f32 %v298, %v549
      %v551 = vpop.f32.mrb[0].mxu0
      %552 = vmatprep.mubr.bf16.mxu0 0
      %553 = vmatmul.mubr.bf16.gmra.mrb[0].mxu0 %v424
      %v554 = vpop.f32.mrb[0].mxu0
      %v555 = vadd.f32 %v298, %v554
      %v556 = vpop.f32.mrb[0].mxu0
      %v557 = vpop.f32.mrb[0].mxu0
      %v558 = vadd.f32 %v298, %v557
      %v559 = vpop.f32.mrb[0].mxu0
      %560 = vmatprep.mubr.bf16.mxu0 0
      %561 = vmatmul.mubr.bf16.gmra.mrb[0].mxu0 %v427
      %v562 = vpop.f32.mrb[0].mxu0
      %v563 = vadd.f32 %v298, %v562
      %v564 = vpop.f32.mrb[0].mxu0
      %v565 = vpop.f32.mrb[0].mxu0
      %v566 = vadd.f32 %v298, %v565
      %v567 = vpop.f32.mrb[0].mxu0
      %568 = vmatprep.mubr.bf16.mxu0 0
      %569 = vmatmul.mubr.bf16.gmra.mrb[0].mxu0 %v430
      %v570 = vpop.f32.mrb[0].mxu0
      %v571 = vadd.f32 %v298, %v570
      %v572 = vpop.f32.mrb[0].mxu0
      %v573 = vpop.f32.mrb[0].mxu0
      %v574 = vadd.f32 %v298, %v573
      %v575 = vpop.f32.mrb[0].mxu0
      %576 = vmatprep.mubr.bf16.mxu0 0
      %577 = vmatmul.mubr.bf16.gmra.mrb[0].mxu0 %v433
      %v578 = vpop.f32.mrb[0].mxu0
      %v579 = vadd.f32 %v298, %v578
      %v580 = vpop.f32.mrb[0].mxu0
      %v581 = vpop.f32.mrb[0].mxu0
      %v582 = vadd.f32 %v298, %v581
      %v583 = vpop.f32.mrb[0].mxu0
      %584 = vmatprep.mubr.bf16.mxu0 0
      %585 = vmatmul.mubr.bf16.gmra.mrb[0].mxu0 %v436
      %v586 = vpop.f32.mrb[0].mxu0
      %v587 = vadd.f32 %v298, %v586
      %v588 = vpop.f32.mrb[0].mxu0
      %v589 = vpop.f32.mrb[0].mxu0
      %v590 = vadd.f32 %v298, %v589
      %v591 = vpop.f32.mrb[0].mxu0
      %592 = vmatprep.mubr.bf16.mxu0 0
      %593 = vmatmul.mubr.bf16.gmra.mrb[0].mxu0 %v439
      %v594 = vpop.f32.mrb[0].mxu0
      %v595 = vadd.f32 %v298, %v594
      %v596 = vpop.f32.mrb[0].mxu0
      %v597 = vpop.f32.mrb[0].mxu0
      %v598 = vadd.f32 %v298, %v597
      %v599 = vpop.f32.mrb[0].mxu0
      %600 = vmatprep.mubr.bf16.mxu0 0
      %601 = vmatmul.mubr.bf16.gmra.mrb[0].mxu0 %v442
      %v602 = vpop.f32.mrb[0].mxu0
      %v603 = vadd.f32 %v298, %v602
      %v604 = vpop.f32.mrb[0].mxu0
      %v605 = vpop.f32.mrb[0].mxu0
      %v606 = vadd.f32 %v298, %v605
      %v607 = vpop.f32.mrb[0].mxu0
      %608 = vdwg.mxu0
      %v609 = vmax.f32 %v483, 0.0
      %v610 = vmax.f32 %v486, 0.0
      %v611 = vmax.f32 %v491, 0.0
      %v612 = vmax.f32 %v494, 0.0
      %v613 = vmax.f32 %v499, 0.0
      %v614 = vmax.f32 %v502, 0.0
      %v615 = vmax.f32 %v507, 0.0
      %v616 = vmax.f32 %v510, 0.0
      %v617 = vmax.f32 %v515, 0.0
      %v618 = vmax.f32 %v518, 0.0
      %v619 = vmax.f32 %v523, 0.0
      %v620 = vmax.f32 %v526, 0.0
      %v621 = vmax.f32 %v531, 0.0
      %v622 = vmax.f32 %v534, 0.0
      %v623 = vmax.f32 %v539, 0.0
      %v624 = vmax.f32 %v542, 0.0
      %v625 = vmax.f32 %v547, 0.0
      %v626 = vmax.f32 %v550, 0.0
      %v627 = vmax.f32 %v555, 0.0
      %v628 = vmax.f32 %v558, 0.0
      %v629 = vmax.f32 %v563, 0.0
      %v630 = vmax.f32 %v566, 0.0
      %v631 = vmax.f32 %v571, 0.0
      %v632 = vmax.f32 %v574, 0.0
      %v633 = vmax.f32 %v579, 0.0
      %v634 = vmax.f32 %v582, 0.0
      %v635 = vmax.f32 %v587, 0.0
      %v636 = vmax.f32 %v590, 0.0
      %v637 = vmax.f32 %v595, 0.0
      %v638 = vmax.f32 %v598, 0.0
      %v639 = vmax.f32 %v603, 0.0
      %v640 = vmax.f32 %v606, 0.0
      %v641 = vpack.c.bf16 %v610, %v609
      %v642 = vpack.c.bf16 %v612, %v611
      %v643 = vpack.c.bf16 %v614, %v613
      %v644 = vpack.c.bf16 %v616, %v615
      %v645 = vpack.c.bf16 %v618, %v617
      %v646 = vpack.c.bf16 %v620, %v619
      %v647 = vpack.c.bf16 %v622, %v621
      %v648 = vpack.c.bf16 %v624, %v623
      %v649 = vpack.c.bf16 %v626, %v625
      %v650 = vpack.c.bf16 %v628, %v627
      %v651 = vpack.c.bf16 %v630, %v629
      %v652 = vpack.c.bf16 %v632, %v631
      %v653 = vpack.c.bf16 %v634, %v633
      %v654 = vpack.c.bf16 %v636, %v635
      %v655 = vpack.c.bf16 %v638, %v637
      %v656 = vpack.c.bf16 %v640, %v639
      %v657 = vld [vmem:[%s3] sm:$0xff]
      %v658 = vld [vmem:[%s3 + $0x8] sm:$0xff]
      %v661 = vunpack.c.l.b16 %v657
      %v662 = vunpack.c.h.b16 %v657
      %v663 = vunpack.c.l.b16 %v658
      %v664 = vunpack.c.h.b16 %v658
      %v665 = vpack.c.b16 %v663, %v661
      %v666 = vpack.c.b16 %v664, %v662
      %669 = vmatprep.subr.bf16.mxu0 0
      %670 = vmatpush1.bf16.msra.mxu0 %v641
      %671 = vmatprep.subr.bf16.mxu0 0
      %672 = vmatpush1.bf16.msra.mxu0 %v642
      %673 = vmatprep.subr.bf16.mxu0 0
      %674 = vmatpush1.bf16.msra.mxu0 %v643
      %675 = vmatprep.subr.bf16.mxu0 0
      %676 = vmatpush1.bf16.msra.mxu0 %v644
      %677 = vmatprep.subr.bf16.mxu0 0
      %678 = vmatpush1.bf16.msra.mxu0 %v645
      %679 = vmatprep.subr.bf16.mxu0 0
      %680 = vmatpush1.bf16.msra.mxu0 %v646
      %681 = vmatprep.subr.bf16.mxu0 0
      %682 = vmatpush1.bf16.msra.mxu0 %v647
      %683 = vmatprep.subr.bf16.mxu0 0
      %684 = vmatpush1.bf16.msra.mxu0 %v648
      %685 = vmatprep.subr.bf16.mxu0 0
      %686 = vmatpush1.bf16.msra.mxu0 %v649
      %687 = vmatprep.subr.bf16.mxu0 0
      %688 = vmatpush1.bf16.msra.mxu0 %v650
      %689 = vmatprep.subr.bf16.mxu0 0
      %690 = vmatpush1.bf16.msra.mxu0 %v651
      %691 = vmatprep.subr.bf16.mxu0 0
      %692 = vmatpush1.bf16.msra.mxu0 %v652
      %693 = vmatprep.subr.bf16.mxu0 0
      %694 = vmatpush1.bf16.msra.mxu0 %v653
      %695 = vmatprep.subr.bf16.mxu0 0
      %696 = vmatpush1.bf16.msra.mxu0 %v654
      %697 = vmatprep.subr.bf16.mxu0 0
      %698 = vmatpush1.bf16.msra.mxu0 %v655
      %699 = vmatprep.subr.bf16.mxu0 0
      %700 = vmatpush1.bf16.msra.mxu0 %v656
      %701 = vmatprep.mubr.bf16.mxu0 %v666
      %702 = vmatmul.mubr.bf16.gmra.mrb[0].mxu0 %v665
      %v703 = vpop.f32.mrb[0].mxu0
      %v704 = vadd.f32 0.0, %v703
      %v705 = vpop.f32.mrb[0].mxu0
      %v706 = vpop.f32.mrb[0].mxu0
      %v707 = vadd.f32 0.0, %v706
      %v708 = vpop.f32.mrb[0].mxu0
      %709 = vdwg.mxu0
      %v710 = vpack.c.bf16 %v707, %v704
      %v711 = vld [vmem:[%s4] sm:$0xf]
      %v712 = vld [vmem:[%s4 + $0x4] sm:$0xf]
      %v713 = vld [vmem:[%s4 + $0x8] sm:$0xf]
      %v714 = vld [vmem:[%s4 + $0xc] sm:$0xf]
      %v715 = vld [vmem:[%s4 + $0x10] sm:$0xf]
      %v716 = vld [vmem:[%s4 + $0x14] sm:$0xf]
      %v717 = vld [vmem:[%s4 + $0x18] sm:$0xf]
      %v718 = vld [vmem:[%s4 + $0x1c] sm:$0xf]
      %v719 = vld [vmem:[%s4 + $0x20] sm:$0xf]
      %v720 = vld [vmem:[%s4 + $0x24] sm:$0xf]
      %v721 = vld [vmem:[%s4 + $0x28] sm:$0xf]
      %v722 = vld [vmem:[%s4 + $0x2c] sm:$0xf]
      %v723 = vld [vmem:[%s4 + $0x30] sm:$0xf]
      %v724 = vld [vmem:[%s4 + $0x34] sm:$0xf]
      %v725 = vld [vmem:[%s4 + $0x38] sm:$0xf]
      %v726 = vld [vmem:[%s4 + $0x3c] sm:$0xf]
      %v727 = vld [vmem:[%s5] sm:$0x1]
      %v729 = vlaneseq
      %v730 = vshrl.u32 %v729, 7
      %v731 = vsub.s32 0, %v730
      %v732 = vrot.slane %v727, %v731
      %v750 = vunpack.c.l.b16 %v711
      %v751 = vunpack.c.l.b16 %v712
      %v752 = vunpack.c.l.b16 %v713
      %v753 = vunpack.c.l.b16 %v714
      %v754 = vunpack.c.l.b16 %v715
      %v755 = vunpack.c.l.b16 %v716
      %v756 = vunpack.c.l.b16 %v717
      %v757 = vunpack.c.l.b16 %v718
      %v758 = vunpack.c.l.b16 %v719
      %v759 = vunpack.c.l.b16 %v720
      %v760 = vunpack.c.l.b16 %v721
      %v761 = vunpack.c.l.b16 %v722
      %v762 = vunpack.c.l.b16 %v723
      %v763 = vunpack.c.l.b16 %v724
      %v764 = vunpack.c.l.b16 %v725
      %v765 = vunpack.c.l.b16 %v726
      %v766 = vpack.c.b16 %v751, %v750
      %v767 = vpack.c.b16 %v753, %v752
      %v768 = vpack.c.b16 %v755, %v754
      %v769 = vpack.c.b16 %v757, %v756
      %v770 = vpack.c.b16 %v759, %v758
      %v771 = vpack.c.b16 %v761, %v760
      %v772 = vpack.c.b16 %v763, %v762
      %v773 = vpack.c.b16 %v765, %v764
      %782 = vmatprep.subr.bf16.mxu0 0
      %783 = vmatpush1.bf16.msra.mxu0 %v766
      %784 = vmatprep.subr.bf16.mxu0 0
      %785 = vmatpush1.bf16.msra.mxu0 %v767
      %786 = vmatprep.subr.bf16.mxu0 0
      %787 = vmatpush1.bf16.msra.mxu0 %v768
      %788 = vmatprep.subr.bf16.mxu0 0
      %789 = vmatpush1.bf16.msra.mxu0 %v769
      %790 = vmatprep.subr.bf16.mxu0 0
      %791 = vmatpush1.bf16.msra.mxu0 %v770
      %792 = vmatprep.subr.bf16.mxu0 0
      %793 = vmatpush1.bf16.msra.mxu0 %v771
      %794 = vmatprep.subr.bf16.mxu0 0
      %795 = vmatpush1.bf16.msra.mxu0 %v772
      %796 = vmatprep.subr.bf16.mxu0 0
      %797 = vmatpush1.bf16.msra.mxu0 %v773
      %798 = vmatprep.subr.bf16.mxu0 0
      %799 = vmatpush1.bf16.msra.mxu0 0
      %800 = vmatprep.subr.bf16.mxu0 0
      %801 = vmatpush1.bf16.msra.mxu0 0
      %802 = vmatprep.subr.bf16.mxu0 0
      %803 = vmatpush1.bf16.msra.mxu0 0
      %804 = vmatprep.subr.bf16.mxu0 0
      %805 = vmatpush1.bf16.msra.mxu0 0
      %806 = vmatprep.subr.bf16.mxu0 0
      %807 = vmatpush1.bf16.msra.mxu0 0
      %808 = vmatprep.subr.bf16.mxu0 0
      %809 = vmatpush1.bf16.msra.mxu0 0
      %810 = vmatprep.subr.bf16.mxu0 0
      %811 = vmatpush1.bf16.msra.mxu0 0
      %812 = vmatprep.subr.bf16.mxu0 0
      %813 = vmatpush1.bf16.msra.mxu0 0
      %814 = vmatprep.mubr.bf16.mxu0 0
      %815 = vmatmul.mubr.bf16.gmra.mrb[0].mxu0 %v710
      %v816 = vpop.f32.mrb[0].mxu0
      %v817 = vadd.f32 %v732, %v816
      %v818 = vpop.f32.mrb[0].mxu0
      %v819 = vpop.f32.mrb[0].mxu0
      %v820 = vadd.f32 %v732, %v819
      %v821 = vpop.f32.mrb[0].mxu0
      %822 = vdwg.mxu0
      %823 = vst [vmem:[%s253] sm:$0xff] %v817
      %824 = vst [vmem:[%s253 + $0x8] sm:$0xff] %v820
      %s825 = smul.u32 2, %s17
      %p826 = scmp.lt.s32.totalorder %s825, 3
      %s827 = scalar_select %p826, %s825, 3
      %s828 = smul.addr %s827, 8
      %s829 = scalar_lea.vmem %s6, %s828
      // Predicated region
      $region45: #{_lambda_.1} parent=43 // pred_check
        %p830 = pneg %p166
      $region46: #{_lambda_.1} parent=43 // pred_check_branch
        %832 = sbr.rel (%p830) target = $region48
      $region47: #{_lambda_.1} parent=43 // pred_region
        %s833 = smul.u32 2, %s17
      $region48: #{_lambda_.1} parent=43 // pred_fallthru
        _
    $region44: #{_lambda_.1} parent=5 // pred_fallthru
      _
    %p834 = scmp.le.s32.totalorder 2, %s12
    // Predicated region
    $region49: #{_lambda_.1} parent=5 // pred_check
      %p835 = pneg %p834
    $region50: #{_lambda_.1} parent=5 // pred_check_branch
      %837 = sbr.rel (%p835) target = $region52
    $region51: #{_lambda_.1} parent=5 // pred_region
      %s838 = ssub.s32 %s12, 2
      // Predicated region
      $region53: #{_lambda_.1} parent=51 // pred_check
        %p839 = pneg %p172
      $region54: #{_lambda_.1} parent=51 // pred_check_branch
        %841 = sbr.rel (%p839) target = $region56
      $region55: #{_lambda_.1} parent=51 // pred_region
        %s842 = smul.u32 2, %s18
        %p843 = scmp.lt.s32.totalorder %s842, 3
        %s844 = scalar_select %p843, %s842, 3
        %s845 = smul.addr %s844, 8
        %s846 = scalar_lea.vmem %s6, %s845
      $region56: #{_lambda_.1} parent=51 // pred_fallthru
        _
    $region52: #{_lambda_.1} parent=5 // pred_fallthru
      _
  $region6: #{_lambda_.1} parent=0 // loop_footer
    %s16 = sadd.s32 1, %s12
  $region7: #{_lambda_.1} parent=0 // loop_footer_branch
    %11 = sbr.rel target = $region3
  $region8: #{_lambda_.1} parent=0 // loop_exit
    _

</llo_original>
